<compile_context>
chip_gen: v5e
topology: v5e:2x2
jax: 0.10.0
libtpu: 0.0.40
codegen_flags: <defaults>
</compile_context>

<pallas_src>
import jax
import jax.numpy as jnp
from jax.experimental import pallas as pl
from jax.experimental.pallas import tpu as pltpu

# ~2 MiB per block, measured in the widest participating dtype.  Worst-case
# pipelined footprint is 2 buffers x (x + out + pos) <= 6 x 2 MiB = 12 MiB.
_TARGET_BLOCK_BYTES = 2 * 1024 * 1024
# Explicit scoped-VMEM limit: > v5e's 16 MiB default, == v6e default, and well
# under v7x's 64 MiB physical VMEM per TensorCore.
_VMEM_LIMIT_BYTES = 32 * 1024 * 1024
# Both grid axes are "parallel": give v7x's 2 TensorCores work and give the
# double-buffered pipeline something to overlap on v5e/v6e.
_MIN_GRID_STEPS = 4


def _sublane(dtype) -> int:
    """Second-minor block-dim multiple for a dtype (8 f32 / 16 bf16 / 32 int8)."""
    return max(8, 32 // jnp.dtype(dtype).itemsize)


def _round_up(x: int, m: int) -> int:
    return ((x + m - 1) // m) * m


def _round_down(x: int, m: int) -> int:
    return (x // m) * m


def _add_pos_kernel(x_ref, pos_ref, o_ref):
    # x_ref: (TB, TS, E) or (TB, T); pos_ref: (TS, E) or (T,) -- broadcasts over batch.
    # Add happens in the promoted dtype (bf16 + f32 -> f32), matching PyTorch.
    o_ref[...] = (x_ref[...] + pos_ref[...]).astype(o_ref.dtype)


def _cost(B, S, E, x_dtype, pos_dtype, out_dtype):
    bx = jnp.dtype(x_dtype).itemsize
    bp = jnp.dtype(pos_dtype).itemsize
    bo = jnp.dtype(out_dtype).itemsize
    # Table rows are read once total (resident across the batch sweep).
    return pl.CostEstimate(
        flops=B * S * E,
        transcendentals=0,
        bytes_accessed=B * S * E * (bx + bo) + S * E * bp,
    )


def _compiler_params():
    return pltpu.CompilerParams(
        dimension_semantics=("parallel", "parallel"),
        vmem_limit_bytes=_VMEM_LIMIT_BYTES,
    )


def _apply_min_steps_3d(S, B, ts, tb, sub, min_steps=_MIN_GRID_STEPS):
    """Best-effort: shrink tiles so the grid has >= min_steps steps."""
    def nsteps(ts_, tb_):
        return pl.cdiv(S, ts_) * pl.cdiv(B, tb_)

    if nsteps(ts, tb) >= min_steps:
        return ts, tb
    # Split the sequence axis first (must stay sublane-aligned when < S).
    max_seq_tiles = pl.cdiv(S, sub)
    want_seq = min(max_seq_tiles, pl.cdiv(min_steps, pl.cdiv(B, tb)))
    if want_seq > pl.cdiv(S, ts):
        ts = min(ts, _round_up(pl.cdiv(S, want_seq), sub))
    if nsteps(ts, tb) >= min_steps:
        return ts, tb
    # Then the batch axis (leading dim: any tile size is legal).
    want_b = min(B, pl.cdiv(min_steps, pl.cdiv(S, ts)))
    if want_b > pl.cdiv(B, tb):
        tb = min(tb, pl.cdiv(B, want_b))
    return ts, tb


def _apply_min_steps_flat(L, B, t, tb, sub_b, min_steps=_MIN_GRID_STEPS):
    """Best-effort: shrink tiles so the grid has >= min_steps steps."""
    def nsteps(t_, tb_):
        return pl.cdiv(L, t_) * pl.cdiv(B, tb_)

    if nsteps(t, tb) >= min_steps:
        return t, tb
    # Split the lane axis first (must stay 128-aligned when < L).
    max_lane_tiles = pl.cdiv(L, 128)
    want_l = min(max_lane_tiles, pl.cdiv(min_steps, pl.cdiv(B, tb)))
    if want_l > pl.cdiv(L, t):
        t = min(t, _round_up(pl.cdiv(L, want_l), 128))
    if nsteps(t, tb) >= min_steps:
        return t, tb
    # Then the batch axis (second-minor dim: multiples of sub_b only, or full B).
    if B > sub_b:
        want_b = min(pl.cdiv(B, sub_b), pl.cdiv(min_steps, pl.cdiv(L, t)))
        if want_b > pl.cdiv(B, tb):
            tb = min(tb, max(sub_b, _round_up(pl.cdiv(B, want_b), sub_b)))
    return t, tb


def _forward_3d(x, pos_table, out_dtype, donate_x):
    """Path for E % 128 == 0: blocks are (TB, TS, E), already lane-dense."""
    B, S, E = x.shape
    # Budget in the widest participating dtype so the pipelined footprint is
    # predictable regardless of mixed precision.
    wbytes = max(jnp.dtype(x.dtype).itemsize,
                 jnp.dtype(pos_table.dtype).itemsize,
                 jnp.dtype(out_dtype).itemsize)
    sub = max(_sublane(x.dtype), _sublane(pos_table.dtype), _sublane(out_dtype))

    row_bytes = E * wbytes
    # Sequence tile: sublane-aligned, sized against the block budget.
    ts = max(sub, _round_down(_TARGET_BLOCK_BYTES // row_bytes, sub))
    ts = min(ts, S)  # full-extent second-minor dim is always legal
    # Batch rows packed per block (leading dim: no alignment constraint).
    tb = max(1, min(B, _TARGET_BLOCK_BYTES // max(1, ts * row_bytes)))
    ts, tb = _apply_min_steps_3d(S, B, ts, tb, sub)

    # Batch innermost (fastest-varying) -> pos block index constant across it,
    # so the shared table tile stays resident in VMEM for the whole batch sweep.
    grid = (pl.cdiv(S, ts), pl.cdiv(B, tb))

    io_alias = {0: 0} if (donate_x and jnp.dtype(out_dtype) == jnp.dtype(x.dtype)) else {}

    return pl.pallas_call(
        _add_pos_kernel,
        out_shape=jax.ShapeDtypeStruct((B, S, E), out_dtype),
        grid_spec=pltpu.PrefetchScalarGridSpec(
            num_scalar_prefetch=0,
            grid=grid,
            in_specs=[
                pl.BlockSpec((tb, ts, E), lambda s, b: (b, s, 0)),
                # Full table passed (no wrapper slice/copy); BlockSpec reads only
                # the rows it needs.  Leading size-1 dim squeezed -> (TS, E).
                pl.BlockSpec((None, ts, E), lambda s, b: (0, s, 0)),
            ],
            out_specs=pl.BlockSpec((tb, ts, E), lambda s, b: (b, s, 0)),
        ),
        compiler_params=_compiler_params(),
        cost_estimate=_cost(B, S, E, x.dtype, pos_table.dtype, out_dtype),
        input_output_aliases=io_alias,
    )(x, pos_table)


def _forward_flat(x, pos_table, out_dtype, donate_x):
    """Lane-dense path for E % 128 != 0: flatten (S, E) -> S*E so stores are
    full-width vst (only the final tail vreg is masked when S*E % 128 != 0)."""
    B, S, E = x.shape
    max_seq = pos_table.shape[1]
    L = S * E
    wbytes = max(jnp.dtype(x.dtype).itemsize,
                 jnp.dtype(pos_table.dtype).itemsize,
                 jnp.dtype(out_dtype).itemsize)
    sub_b = max(_sublane(x.dtype), _sublane(pos_table.dtype), _sublane(out_dtype))

    row_w = L * wbytes
    tb_min = B if B <= sub_b else sub_b  # smallest legal batch tile (second-minor dim)
    if tb_min * row_w <= _TARGET_BLOCK_BYTES:
        # Full rows fit: full-extent last dim (legal even if L % 128 != 0).
        t = L
        tb_cap = _TARGET_BLOCK_BYTES // row_w
        tb = B if tb_cap >= B else max(sub_b, _round_down(tb_cap, sub_b))
    else:
        # Tile the lane axis in 128-aligned chunks against the budget.
        tb = tb_min
        t = min(L, max(128, _round_down(_TARGET_BLOCK_BYTES // (tb * wbytes), 128)))
    t, tb = _apply_min_steps_flat(L, B, t, tb, sub_b)

    x_flat = x.reshape(B, L)  # metadata-only for a contiguous activation tensor
    if S == max_seq:
        pos_flat = pos_table.reshape(1, L)  # metadata-only: no table copy
    else:
        # Small one-time copy of only the used rows of the batch-shared table.
        pos_flat = pos_table[:, :S, :].reshape(1, L)

    # Batch innermost -> pos tile stays resident across the batch sweep.
    grid = (pl.cdiv(L, t), pl.cdiv(B, tb))

    io_alias = {0: 0} if (donate_x and jnp.dtype(out_dtype) == jnp.dtype(x.dtype)) else {}

    out = pl.pallas_call(
        _add_pos_kernel,
        out_shape=jax.ShapeDtypeStruct((B, L), out_dtype),
        grid_spec=pltpu.PrefetchScalarGridSpec(
            num_scalar_prefetch=0,
            grid=grid,
            in_specs=[
                pl.BlockSpec((tb, t), lambda l, b: (b, l)),
                pl.BlockSpec((None, t), lambda l, b: (0, l)),  # squeezed -> (T,)
            ],
            out_specs=pl.BlockSpec((tb, t), lambda l, b: (b, l)),
        ),
        compiler_params=_compiler_params(),
        cost_estimate=_cost(B, S, E, x.dtype, pos_table.dtype, out_dtype),
        input_output_aliases=io_alias,
    )(x_flat, pos_flat)
    return out.reshape(B, S, E)


def learned_positional_encoding(x: jax.Array, position_embeddings: jax.Array,
                                *, donate_x: bool = False) -> jax.Array:
    """Forward of LearnedPositionalEncoding (eval-mode dropout = identity).

    x: (B, S, E); position_embeddings: (1, max_seq_length, E) -> (B, S, E).
    donate_x: set True only if the caller donates x and dtypes match; the output
    then aliases the input buffer (halves peak HBM allocation).
    """
    B, S, E = x.shape
    if position_embeddings.ndim != 3 or position_embeddings.shape[2] != E:
        raise ValueError("position_embeddings must be (1, max_seq_length, embedding_dim)")
    max_seq_length = position_embeddings.shape[1]
    if S > max_seq_length:
        raise ValueError(
            f"Sequence length ({S}) exceeds maximum length ({max_seq_length})"
        )

    out_dtype = jnp.promote_types(x.dtype, position_embeddings.dtype)

    if E % 128 == 0:
        # Last dim already lane-dense; read the table in place (no wrapper slice).
        return _forward_3d(x, position_embeddings, out_dtype, donate_x)
    # Any non-lane-aligned E (including ragged S*E): flatten trailing dims so
    # stores are full-lane vst with at most one masked tail vreg.
    return _forward_flat(x, position_embeddings, out_dtype, donate_x)


if __name__ == "__main__":
    key = jax.random.PRNGKey(0)
    k1, k2, k3, k4, k5, k6 = jax.random.split(key, 6)

    # Case 1 (module's small test shape): E=32 < 128 -> flattened lane-dense path,
    # S < max_seq_length -> sliced table.  batch=2, seq=8, emb=32, max_seq=16.
    B, S, E, MAX_S = 2, 8, 32, 16
    x1 = jax.random.normal(k1, (B, S, E), dtype=jnp.float32)
    # Parameter init mirrors nn.init.normal_(mean=0, std=0.02) on zeros(1, max_seq, E)
    pos1 = 0.02 * jax.random.normal(k2, (1, MAX_S, E), dtype=jnp.float32)
    out1 = jax.block_until_ready(learned_positional_encoding(x1, pos1))
    ref1 = x1 + pos1[:, :S, :]
    assert out1.shape == ref1.shape and out1.dtype == ref1.dtype
    assert jnp.allclose(out1, ref1, atol=1e-6), "case 1 mismatch vs reference"

    # Case 2: E=128 -> 3D tiled path, mixed dtypes (bf16 activations + f32 table)
    # to exercise PyTorch-style type promotion inside the kernel.
    B, S, E, MAX_S = 2, 16, 128, 32
    x2 = jax.random.normal(k3, (B, S, E), dtype=jnp.bfloat16)
    pos2 = 0.02 * jax.random.normal(k4, (1, MAX_S, E), dtype=jnp.float32)
    out2 = jax.block_until_ready(learned_positional_encoding(x2, pos2))
    ref2 = x2 + pos2[:, :S, :]  # JAX promotes bf16 + f32 -> f32, same as torch
    assert out2.shape == ref2.shape and out2.dtype == ref2.dtype == jnp.float32
    assert jnp.allclose(out2, ref2, atol=1e-5), "case 2 mismatch vs reference"

    # Case 3: ragged E (E % 128 != 0 and S*E % 128 != 0) with S == max_seq_length
    # -> flat path, 128-aligned lane tiles (masked tail only), metadata-only
    # table reshape (no slice/copy).
    B, S, E, MAX_S = 2, 8, 100, 8
    x3 = jax.random.normal(k5, (B, S, E), dtype=jnp.float32)
    pos3 = 0.02 * jax.random.normal(k6, (1, MAX_S, E), dtype=jnp.float32)
    out3 = jax.block_until_ready(learned_positional_encoding(x3, pos3))
    ref3 = x3 + pos3[:, :S, :]
    assert out3.shape == ref3.shape and out3.dtype == ref3.dtype
    assert jnp.allclose(out3, ref3, atol=1e-6), "case 3 mismatch vs reference"

    print("KERNEL_OK")
</pallas_src>

<mosaic_0001>
module attributes {stable_mosaic.version = 11 : i64} {
  func.func @_add_pos_kernel(%arg0: i32, %arg1: i32, %arg2: memref<2x128xf32, #tpu.memory_space<vmem>>, %arg3: memref<1x128xf32, #tpu.memory_space<vmem>>, %arg4: memref<2x128xf32, #tpu.memory_space<vmem>>) attributes {dimension_semantics = [#tpu.dimension_semantics<parallel>, #tpu.dimension_semantics<parallel>], iteration_bounds = array<i64: 2, 1>, scalar_prefetch = 0 : i64, scratch_operands = 0 : i64, tpu.core_type = #tpu.core_type<tc>, window_params = [{transform_indices = @transform_0, window_bounds = array<i64: 2, 128>}, {transform_indices = @transform_1, window_bounds = array<i64: 1, 128>}, {transform_indices = @transform_2, window_bounds = array<i64: 2, 128>}]} {
    %c0 = arith.constant 0 : index
    %c0_0 = arith.constant 0 : index
    %0 = vector.load %arg2[%c0, %c0_0] : memref<2x128xf32, #tpu.memory_space<vmem>>, vector<2x128xf32>
    %c0_1 = arith.constant 0 : index
    %c0_2 = arith.constant 0 : index
    %1 = vector.load %arg3[%c0_1, %c0_2] : memref<1x128xf32, #tpu.memory_space<vmem>>, vector<1x128xf32>
    %2 = vector.shape_cast %1 : vector<1x128xf32> to vector<128xf32>
    %3 = vector.shape_cast %2 : vector<128xf32> to vector<1x128xf32>
    %4 = vector.broadcast %3 : vector<1x128xf32> to vector<2x128xf32>
    %5 = arith.addf %0, %4 : vector<2x128xf32>
    %c0_3 = arith.constant 0 : index
    %c0_4 = arith.constant 0 : index
    %6 = vector.load %arg4[%c0_3, %c0_4] : memref<2x128xf32, #tpu.memory_space<vmem>>, vector<2x128xf32>
    tpu.vector_store %arg4[%c0_3, %c0_4], %5 {strides = array<i32>} : memref<2x128xf32, #tpu.memory_space<vmem>>, vector<2x128xf32>,
    return
  }
  func.func @transform_0(%arg0: i32, %arg1: i32) -> (i32, i32) {
    %c0_i32 = arith.constant 0 : i32
    return %arg1, %arg0 : i32, i32
  }
  func.func @transform_1(%arg0: i32, %arg1: i32) -> (i32, i32) {
    %c0_i32 = arith.constant 0 : i32
    %c0_i32_0 = arith.constant 0 : i32
    return %c0_i32, %arg0 : i32, i32
  }
  func.func @transform_2(%arg0: i32, %arg1: i32) -> (i32, i32) {
    %c0_i32 = arith.constant 0 : i32
    return %arg1, %arg0 : i32, i32
  }
}

</mosaic_0001>

<llo_original>
// kernel: tpu_custom_call.1
$region0: #{tpu_custom_call.1}
  #allocation0 [shape = 'u32[]', space=smem, size = 0x4, offset = 0x4, fixed_abs, tag = 'smem constant byte address 0x4 - core index']
  #allocation1 [shape = 'u32[72,128]{1,0:T(1,128)}', space=vmem, size = 0x9000, scoped, tag = 'internal scratch']
  %s0 = inlined_call_operand.hbm [shape: f32[2,256], index: 0, kind: input, shape index: {}]
  %s1 = inlined_call_operand.hbm [shape: f32[1,256], index: 1, kind: input, shape index: {}]
  %s2 = inlined_call_operand.hbm [shape: f32[2,256], index: 2, kind: output, shape index: {}]
  %s3 = sld [smem:[#allocation0]]
  $region49: #{tpu_custom_call.1} parent=0
    _
  %s5 = ssub.s32 1, %s3
  %s6 = scalar_select 0, %s5, %s3
  $region1: #{tpu_custom_call.1} parent=0
    #allocation2 [shape = 'u8[2048]{0}', space=vmem, size = 0x800, scoped, tag = 'input window, operand 0']
    #allocation3 [shape = 's32[2]{0}', space=sflag, size = 0x8, scoped, tag = 'scoped memory for tpu_custom_call.1']
    #allocation4 [shape = 's32[2]{0}', space=sflag, size = 0x8, scoped, tag = 'scoped memory for tpu_custom_call.1']
    #allocation5 [shape = 'u8[1024]{0}', space=vmem, size = 0x400, scoped, tag = 'input window, operand 1']
    #allocation6 [shape = 's32[2]{0}', space=sflag, size = 0x8, scoped, tag = 'scoped memory for tpu_custom_call.1']
    #allocation7 [shape = 'u8[2048]{0}', space=vmem, size = 0x800, scoped, tag = 'output window, operand 0']
    %7 = vsyncpa [#allocation3], 0
    %s8 = scalar_lea.sflag [#allocation3], 1
    %9 = vsyncpa %s8, 0
    %10 = vsyncpa [#allocation6], 0
    %s11 = scalar_lea.sflag [#allocation6], 1
    %12 = vsyncpa %s11, 0
    %13 = vsyncpa [#allocation4], 0
    %s14 = scalar_lea.sflag [#allocation4], 1
    %15 = vsyncpa %s14, 0
    loop: start=0, step=1, limit=4
    $region2: #{tpu_custom_call.1} parent=1 // loop_pre_header
      _
    $region3: #{tpu_custom_call.1} parent=1 // loop_header
      %s17 = sphi 0, %s21
      %p18 = scmp.ge.s32.totalorder %s17, 4
      %s24 = sphi 0, %s36
      %s25 = sphi 0, %s32
      %s26 = sphi 0, %s24
      %s27 = sphi 0, %s25
      %s28 = sphi 0, %s26
      %s29 = sphi 0, %s27
      %s41 = sphi 0, %s43
      %s44 = sphi 0, %s41
      %s45 = sphi 0, %s44
      %s61 = sphi 0, %s45
      %s67 = sphi 0, %s69
      %s70 = sphi 0, %s67
      %s71 = sphi 0, %s70
      %s87 = sphi 0, %s71
      %s95 = sphi 0, %s97
      %s98 = sphi 0, %s95
      %s99 = sphi 0, %s98
      %s115 = sphi 0, %s99
    $region4: #{tpu_custom_call.1} parent=1 // loop_header_branch
      %20 = sbr.rel (%p18) target = $region8
    $region5: #{tpu_custom_call.1} parent=1 // loop_body
      %s22 = ssub.s32 %s17, 1
      %s23 = ssub.s32 %s17, 2
      %s30 = sadd.s32 1, %s25
      %p31 = scmp.ge.s32.totalorder %s30, 1
      %s32 = scalar_select %p31, 0, %s30
      %s33 = sadd.s32 1, %s24
      %s34 = scalar_select %p31, %s33, %s24
      %p35 = scmp.ge.s32.totalorder %s34, 2
      %s36 = scalar_select %p35, 0, %s34
      %s37 = ssub.s32 %s25, %s32
      %s38 = ssub.s32 %s24, %s36
      %s39 = sor.u32 %s37, %s38
      %p40 = scmp.eq.s32.totalorder %s39, 0
      %s42 = sadd.s32 %s41, 1
      %s43 = scalar_select %p40, %s41, %s42
      %p46 = pneg %p40
      %p47 = scmp.eq.s32.totalorder %s17, 1
      %p48 = por %p46, %p47
      %p49 = scmp.ne.s32.totalorder %s41, %s44
      %p50 = scmp.eq.s32.totalorder %s17, 0
      %p51 = por %p49, %p50
      %p52 = scmp.ne.s32.totalorder %s41, %s44
      %p53 = scmp.eq.s32.totalorder %s22, 1
      %p54 = por %p52, %p53
      %p55 = scmp.ne.s32.totalorder %s44, %s45
      %p56 = scmp.eq.s32.totalorder %s22, 0
      %p57 = por %p55, %p56
      %p58 = scmp.ne.s32.totalorder %s44, %s45
      %p59 = scmp.eq.s32.totalorder %s23, 1
      %p60 = por %p58, %p59
      %p62 = scmp.ne.s32.totalorder %s45, %s61
      %p63 = scmp.eq.s32.totalorder %s23, 0
      %p64 = por %p62, %p63
      %s65 = ssub.s32 %s24, %s36
      %p66 = scmp.eq.s32.totalorder %s65, 0
      %s68 = sadd.s32 %s67, 1
      %s69 = scalar_select %p66, %s67, %s68
      %p72 = pneg %p66
      %p73 = scmp.eq.s32.totalorder %s17, 1
      %p74 = por %p72, %p73
      %p75 = scmp.ne.s32.totalorder %s67, %s70
      %p76 = scmp.eq.s32.totalorder %s17, 0
      %p77 = por %p75, %p76
      %p78 = scmp.ne.s32.totalorder %s67, %s70
      %p79 = scmp.eq.s32.totalorder %s22, 1
      %p80 = por %p78, %p79
      %p81 = scmp.ne.s32.totalorder %s70, %s71
      %p82 = scmp.eq.s32.totalorder %s22, 0
      %p83 = por %p81, %p82
      %p84 = scmp.ne.s32.totalorder %s70, %s71
      %p85 = scmp.eq.s32.totalorder %s23, 1
      %p86 = por %p84, %p85
      %p88 = scmp.ne.s32.totalorder %s71, %s87
      %p89 = scmp.eq.s32.totalorder %s23, 0
      %p90 = por %p88, %p89
      %s91 = ssub.s32 %s25, %s32
      %s92 = ssub.s32 %s24, %s36
      %s93 = sor.u32 %s91, %s92
      %p94 = scmp.eq.s32.totalorder %s93, 0
      %s96 = sadd.s32 %s95, 1
      %s97 = scalar_select %p94, %s95, %s96
      %p100 = pneg %p94
      %p101 = scmp.eq.s32.totalorder %s17, 1
      %p102 = por %p100, %p101
      %p103 = scmp.ne.s32.totalorder %s95, %s98
      %p104 = scmp.eq.s32.totalorder %s17, 0
      %p105 = por %p103, %p104
      %p106 = scmp.ne.s32.totalorder %s95, %s98
      %p107 = scmp.eq.s32.totalorder %s22, 1
      %p108 = por %p106, %p107
      %p109 = scmp.ne.s32.totalorder %s98, %s99
      %p110 = scmp.eq.s32.totalorder %s22, 0
      %p111 = por %p109, %p110
      %p112 = scmp.ne.s32.totalorder %s98, %s99
      %p113 = scmp.eq.s32.totalorder %s23, 1
      %p114 = por %p112, %p113
      %p116 = scmp.ne.s32.totalorder %s99, %s115
      %p117 = scmp.eq.s32.totalorder %s23, 0
      %p118 = por %p116, %p117
      %p119 = scmp.le.s32.totalorder 1, %s17
      %p120 = scmp.lt.s32.totalorder %s17, 3
      %p121 = pnand %p119, %p120
      %p122 = pneg %p121
      // Predicated region
      $region9: #{tpu_custom_call.1} parent=5 // pred_check
        _
      $region10: #{tpu_custom_call.1} parent=5 // pred_check_branch
        %124 = sbr.rel (%p121) target = $region12
      $region11: #{tpu_custom_call.1} parent=5 // pred_region
        %s125 = ssub.s32 %s17, 1
      $region12: #{tpu_custom_call.1} parent=5 // pred_fallthru
        _
      %p126 = scmp.lt.s32.totalorder %s17, 2
      // Predicated region
      $region13: #{tpu_custom_call.1} parent=5 // pred_check
        %p127 = pneg %p126
      $region14: #{tpu_custom_call.1} parent=5 // pred_check_branch
        %129 = sbr.rel (%p127) target = $region16
      $region15: #{tpu_custom_call.1} parent=5 // pred_region
        // Predicated region
        $region17: #{tpu_custom_call.1} parent=15 // pred_check
          %p130 = pneg %p51
        $region18: #{tpu_custom_call.1} parent=15 // pred_check_branch
          %132 = sbr.rel (%p130) target = $region20
        $region19: #{tpu_custom_call.1} parent=15 // pred_region
          %s133 = sand.u32 %s41, 1
          %s134 = scalar_lea.sflag [#allocation3], %s133
          %s135 = sand.u32 %s41, 1
          %s136 = smul.addr %s135, 2
          %s137 = scalar_lea.vmem [#allocation2], %s136
          %139 = vsyncadd %s134, 0
          %s140 = smul.addr %s25, 2
          %s141 = sadd.s32 %s24, %s140
          %s142 = smul.addr %s141, 2
          %s143 = scalar_lea.hbm %s0, %s142
          %s145 = sshll.u32 %s143, 4
          %s146 = int_to_ptr.hbm [resolvable:$true] %s145
          %s147 = sshll.u32 %s137, 4
          %s148 = int_to_ptr.vmem [resolvable:$true] %s147
          %150 = dma.hbm_to_vmem [thread:$0]  %s146, 32, %s148, %s134
        $region20: #{tpu_custom_call.1} parent=15 // pred_fallthru
          _
        // Predicated region
        $region21: #{tpu_custom_call.1} parent=15 // pred_check
          %p151 = pneg %p77
        $region22: #{tpu_custom_call.1} parent=15 // pred_check_branch
          %153 = sbr.rel (%p151) target = $region24
        $region23: #{tpu_custom_call.1} parent=15 // pred_region
          %s154 = sand.u32 %s67, 1
          %s155 = scalar_lea.sflag [#allocation6], %s154
          %s156 = sand.u32 %s67, 1
          %s157 = scalar_lea.vmem [#allocation5], %s156
          %159 = vsyncadd %s155, 0
          %s160 = scalar_lea.hbm %s1, %s24
          %s162 = sshll.u32 %s160, 4
          %s163 = int_to_ptr.hbm [resolvable:$true] %s162
          %s164 = sshll.u32 %s157, 4
          %s165 = int_to_ptr.vmem [resolvable:$true] %s164
          %167 = dma.hbm_to_vmem [thread:$0]  %s163, 16, %s165, %s155
        $region24: #{tpu_custom_call.1} parent=15 // pred_fallthru
          _
      $region16: #{tpu_custom_call.1} parent=5 // pred_fallthru
        _
      %p168 = scmp.le.s32.totalorder 1, %s17
      %p169 = scmp.lt.s32.totalorder %s17, 3
      %p170 = pnand %p168, %p169
      %p171 = pneg %p170
      // Predicated region
      $region25: #{tpu_custom_call.1} parent=5 // pred_check
        _
      $region26: #{tpu_custom_call.1} parent=5 // pred_check_branch
        %173 = sbr.rel (%p170) target = $region28
      $region27: #{tpu_custom_call.1} parent=5 // pred_region
        %s174 = ssub.s32 %s17, 1
        %s175 = sand.u32 %s44, 1
        %s176 = scalar_lea.sflag [#allocation3], %s175
        %s177 = sand.u32 %s44, 1
        %s178 = smul.addr %s177, 2
        %s179 = scalar_lea.vmem [#allocation2], %s178
        // Predicated region
        $region29: #{tpu_custom_call.1} parent=27 // pred_check
          %p180 = pneg %p57
        $region30: #{tpu_custom_call.1} parent=27 // pred_check_branch
          %182 = sbr.rel (%p180) target = $region32
        $region31: #{tpu_custom_call.1} parent=27 // pred_region
          %184 = dma.done %s176, 32
        $region32: #{tpu_custom_call.1} parent=27 // pred_fallthru
          _
        %s185 = sand.u32 %s70, 1
        %s186 = scalar_lea.sflag [#allocation6], %s185
        %s187 = sand.u32 %s70, 1
        %s188 = scalar_lea.vmem [#allocation5], %s187
        // Predicated region
        $region33: #{tpu_custom_call.1} parent=27 // pred_check
          %p189 = pneg %p83
        $region34: #{tpu_custom_call.1} parent=27 // pred_check_branch
          %191 = sbr.rel (%p189) target = $region36
        $region35: #{tpu_custom_call.1} parent=27 // pred_region
          %193 = dma.done %s186, 16
        $region36: #{tpu_custom_call.1} parent=27 // pred_fallthru
          _
        %s194 = sand.u32 %s44, 1
        %s195 = scalar_lea.sflag [#allocation3], %s194
        %s196 = sand.u32 %s44, 1
        %s197 = smul.addr %s196, 2
        %s198 = scalar_lea.vmem [#allocation2], %s197
        %p199 = pneg %p57
        %p200 = pneg %p54
        %s201 = sand.u32 %s70, 1
        %s202 = scalar_lea.sflag [#allocation6], %s201
        %s203 = sand.u32 %s70, 1
        %s204 = scalar_lea.vmem [#allocation5], %s203
        %p205 = pneg %p83
        %p206 = pneg %p80
        %p207 = pneg %p111
        %p208 = pneg %p108
        %s209 = sand.u32 %s98, 1
        %s210 = scalar_lea.sflag [#allocation4], %s209
        %s211 = sand.u32 %s98, 1
        %s212 = smul.addr %s211, 2
        %s213 = scalar_lea.vmem [#allocation7], %s212
        %v214 = vld [vmem:[%s179] sm:$0x3]
        %v215 = vld [vmem:[%s188] sm:$0x1]
        %v217 = vperm.slane %v215, 0
        %v219 = vadd.f32 %v214, %v217
        %220 = vst [vmem:[%s213] sm:$0x3] %v219
        %s221 = sand.u32 %s98, 1
        %s222 = scalar_lea.sflag [#allocation4], %s221
        %s223 = sand.u32 %s98, 1
        %s224 = smul.addr %s223, 2
        %s225 = scalar_lea.vmem [#allocation7], %s224
        // Predicated region
        $region37: #{tpu_custom_call.1} parent=27 // pred_check
          %p226 = pneg %p108
        $region38: #{tpu_custom_call.1} parent=27 // pred_check_branch
          %228 = sbr.rel (%p226) target = $region40
        $region39: #{tpu_custom_call.1} parent=27 // pred_region
          %230 = vsyncadd %s222, 0
          %s231 = smul.addr %s27, 2
          %s232 = sadd.s32 %s26, %s231
          %s233 = smul.addr %s232, 2
          %s234 = scalar_lea.hbm %s2, %s233
          %s236 = sshll.u32 %s225, 4
          %s237 = int_to_ptr.vmem [resolvable:$true] %s236
          %s238 = sshll.u32 %s234, 4
          %s239 = int_to_ptr.hbm [resolvable:$true] %s238
          %241 = dma.vmem_to_hbm [thread:$0]  %s237, 32, %s239, %s222
        $region40: #{tpu_custom_call.1} parent=27 // pred_fallthru
          _
      $region28: #{tpu_custom_call.1} parent=5 // pred_fallthru
        _
      %p242 = scmp.le.s32.totalorder 2, %s17
      // Predicated region
      $region41: #{tpu_custom_call.1} parent=5 // pred_check
        %p243 = pneg %p242
      $region42: #{tpu_custom_call.1} parent=5 // pred_check_branch
        %245 = sbr.rel (%p243) target = $region44
      $region43: #{tpu_custom_call.1} parent=5 // pred_region
        %s246 = ssub.s32 %s17, 2
        // Predicated region
        $region45: #{tpu_custom_call.1} parent=43 // pred_check
          %p247 = pneg %p114
        $region46: #{tpu_custom_call.1} parent=43 // pred_check_branch
          %249 = sbr.rel (%p247) target = $region48
        $region47: #{tpu_custom_call.1} parent=43 // pred_region
          %s250 = sand.u32 %s99, 1
          %s251 = scalar_lea.sflag [#allocation4], %s250
          %s252 = sand.u32 %s99, 1
          %s253 = smul.addr %s252, 2
          %s254 = scalar_lea.vmem [#allocation7], %s253
          %256 = dma.done %s251, 32
        $region48: #{tpu_custom_call.1} parent=43 // pred_fallthru
          _
      $region44: #{tpu_custom_call.1} parent=5 // pred_fallthru
        _
    $region6: #{tpu_custom_call.1} parent=1 // loop_footer
      %s21 = sadd.s32 1, %s17
    $region7: #{tpu_custom_call.1} parent=1 // loop_footer_branch
      %16 = sbr.rel target = $region3
    $region8: #{tpu_custom_call.1} parent=1 // loop_exit
      _
    %257 = vsyncpa [#allocation3], 1
    %s258 = scalar_lea.sflag [#allocation3], 1
    %259 = vsyncpa %s258, 1
    %260 = vsyncpa [#allocation6], 1
    %s261 = scalar_lea.sflag [#allocation6], 1
    %262 = vsyncpa %s261, 1
    %263 = vsyncpa [#allocation4], 1
    %s264 = scalar_lea.sflag [#allocation4], 1
    %265 = vsyncpa %s264, 1

</llo_original>
